<compile_context>
chip_gen: v7x
topology: tpu7x:2x2x1
jax: 0.10.0
libtpu: 0.0.40
codegen_flags: <defaults>
</compile_context>

<pallas_src>
import functools

import jax
import jax.numpy as jnp
from jax.experimental import pallas as pl
from jax.experimental.pallas import tpu as pltpu

SMOOTH = 1e-5
_LANE = 128
_SUBLANE = 8
_MAX_BLOCK_BYTES = 4 * 1024 * 1024  # per-input VMEM block (before double-buffering)


def _make_dice_kernel(use_softmax: bool, hw: int, tile_rows: int, needs_mask: bool):
    """Kernel over one (C, tile_rows, 128) spatial tile of one batch element."""

    def _sum_spatial(v):  # (C, R, 128) -> (C, 1)
        s = jnp.sum(v, axis=2, keepdims=True)   # lane reduce   -> (C, R, 1)
        s = jnp.sum(s, axis=1, keepdims=True)   # sublane reduce -> (C, 1, 1)
        return s.reshape(-1, 1)

    def kernel(x_ref, t_ref, out_ref):
        j = pl.program_id(1)  # spatial-chunk index (accumulation axis)

        @pl.when(j == 0)
        def _():
            out_ref[...] = jnp.zeros_like(out_ref)

        x = x_ref[...].astype(jnp.float32)  # (C, tile_rows, 128)
        t = t_ref[...].astype(jnp.float32)  # (C, tile_rows, 128)

        if use_softmax:
            # Channel softmax: C is the leading (untiled) dim -> pure
            # elementwise work across C slices, no cross-lane shuffles.
            score = jax.nn.softmax(x, axis=0)
        else:
            score = jax.nn.sigmoid(x)

        if needs_mask:
            # Zero the activation on the zero-padded spatial tail.  The target
            # is zero-padded already, so only `score` needs masking.
            row = jax.lax.broadcasted_iota(jnp.int32, (1, tile_rows, _LANE), 1)
            lane = jax.lax.broadcasted_iota(jnp.int32, (1, tile_rows, _LANE), 2)
            pos = (j * tile_rows + row) * _LANE + lane
            score = jnp.where(pos < hw, score, 0.0)

        intersect = _sum_spatial(score * t)      # (C, 1)
        y_sum = _sum_spatial(t * t)              # (C, 1)
        z_sum = _sum_spatial(score * score)      # (C, 1)

        out_ref[...] += jnp.concatenate([intersect, y_sum, z_sum], axis=1)  # (C, 3)

    return kernel


@functools.partial(jax.jit, static_argnames=("softmax",))
def dice_loss(inputs, target, weight=None, softmax=False):
    """Pallas implementation of DiceLoss.forward (inputs/target: (N, C, H, W))."""
    assert inputs.shape == target.shape, (
        f"predict {inputs.shape} & target {target.shape} shape do not match"
    )
    n, c, h, w = inputs.shape
    if weight is None:
        weight = [1.0] * c
    weight = jnp.asarray(weight, jnp.float32)

    hw = h * w
    rows = pl.cdiv(hw, _LANE)

    # Spatial row-tile: as big as possible under the per-block VMEM budget,
    # sublane-aligned, and split so the padded row count stays minimal.
    itemsize = max(inputs.dtype.itemsize, target.dtype.itemsize)
    cap_rows = max(
        _SUBLANE,
        (_MAX_BLOCK_BYTES // (c * _LANE * itemsize)) // _SUBLANE * _SUBLANE,
    )
    n_chunks = pl.cdiv(rows, cap_rows)
    tile_rows = pl.cdiv(pl.cdiv(rows, n_chunks), _SUBLANE) * _SUBLANE
    rows_pad = tile_rows * n_chunks
    hw_pad = rows_pad * _LANE

    # Free reshapes (contiguous splits of the trailing dim); pad only if needed.
    x = inputs.reshape(n, c, hw)
    t = target.reshape(n, c, hw)
    if hw_pad != hw:
        pad = ((0, 0), (0, 0), (0, hw_pad - hw))
        x = jnp.pad(x, pad)
        t = jnp.pad(t, pad)
    x = x.reshape(n, c, rows_pad, _LANE)
    t = t.reshape(n, c, rows_pad, _LANE)

    in_spec = pl.BlockSpec((None, c, tile_rows, _LANE), lambda b, j: (b, 0, j, 0))
    out_spec = pl.BlockSpec((None, c, 3), lambda b, j: (b, 0, 0))

    elems = n * c * hw
    cost = pl.CostEstimate(
        flops=10 * elems,
        transcendentals=elems,
        bytes_accessed=int(
            elems * (inputs.dtype.itemsize + target.dtype.itemsize) + n * c * 3 * 4
        ),
    )

    partial_sums = pl.pallas_call(
        _make_dice_kernel(softmax, hw, tile_rows, hw_pad != hw),
        out_shape=jax.ShapeDtypeStruct((n, c, 3), jnp.float32),
        grid=(n, n_chunks),
        in_specs=[in_spec, in_spec],
        out_specs=out_spec,
        compiler_params=pltpu.CompilerParams(
            dimension_semantics=("parallel", "arbitrary"),
            vmem_limit_bytes=32 * 1024 * 1024,
        ),
        cost_estimate=cost,
    )(x, t)

    # Finalize in plain JAX (tiny): combine batch rows, per-class dice, weighted mean.
    sums = jnp.sum(partial_sums, axis=0)  # (C, 3)
    intersect, y_sum, z_sum = sums[:, 0], sums[:, 1], sums[:, 2]
    per_class = 1.0 - (2.0 * intersect + SMOOTH) / (z_sum + y_sum + SMOOTH)
    return jnp.sum(per_class * weight) / c


def ref_dice_loss(inputs, target, weight=None, softmax=False):
    """Pure-JAX reference mirroring the PyTorch module exactly."""
    n_classes = inputs.shape[1]
    if softmax:
        probs = jax.nn.softmax(inputs, axis=1)
    else:
        probs = jax.nn.sigmoid(inputs)
    if weight is None:
        weight = [1.0] * n_classes
    loss = 0.0
    for i in range(n_classes):
        score = probs[:, i]
        t = target[:, i].astype(jnp.float32)
        intersect = jnp.sum(score * t)
        y_sum = jnp.sum(t * t)
        z_sum = jnp.sum(score * score)
        cls_loss = 1.0 - (2.0 * intersect + SMOOTH) / (z_sum + y_sum + SMOOTH)
        loss = loss + cls_loss * weight[i]
    return loss / n_classes


if __name__ == "__main__":
    key = jax.random.PRNGKey(0)
    k_in, k_tg, k_in2, k_tg2, k_in3, k_tg3 = jax.random.split(key, 6)

    # Case 1: N=2, C=4, 16x16 (spatial flattens to 256 -> padded/masked rows).
    N, C, H, W = 2, 4, 16, 16
    inputs = jax.random.normal(k_in, (N, C, H, W), dtype=jnp.float32)
    labels = jax.random.randint(k_tg, (N, H, W), 0, C)
    target = jax.nn.one_hot(labels, C, axis=1).astype(jnp.float32)

    out = jax.block_until_ready(dice_loss(inputs, target, softmax=False))
    ref = ref_dice_loss(inputs, target, softmax=False)
    assert jnp.allclose(out, ref, atol=1e-5, rtol=1e-5), (out, ref)

    wts = [1.0, 0.5, 2.0, 1.5]
    out_sm = jax.block_until_ready(
        dice_loss(inputs, target, weight=jnp.asarray(wts, jnp.float32), softmax=True)
    )
    ref_sm = ref_dice_loss(inputs, target, weight=wts, softmax=True)
    assert jnp.allclose(out_sm, ref_sm, atol=1e-5, rtol=1e-5), (out_sm, ref_sm)

    # Case 2: non-lane-aligned spatial (10x10 -> padded + masked path), C=3.
    N2, C2, H2, W2 = 2, 3, 10, 10
    inputs2 = jax.random.normal(k_in2, (N2, C2, H2, W2), dtype=jnp.float32)
    labels2 = jax.random.randint(k_tg2, (N2, H2, W2), 0, C2)
    target2 = jax.nn.one_hot(labels2, C2, axis=1).astype(jnp.float32)

    out2 = jax.block_until_ready(dice_loss(inputs2, target2, softmax=True))
    ref2 = ref_dice_loss(inputs2, target2, softmax=True)
    assert jnp.allclose(out2, ref2, atol=1e-5, rtol=1e-5), (out2, ref2)

    # Case 3: exactly tile-aligned spatial (32x32 = 8 rows of 128, no mask/pad).
    N3, C3, H3, W3 = 2, 4, 32, 32
    inputs3 = jax.random.normal(k_in3, (N3, C3, H3, W3), dtype=jnp.float32)
    labels3 = jax.random.randint(k_tg3, (N3, H3, W3), 0, C3)
    target3 = jax.nn.one_hot(labels3, C3, axis=1).astype(jnp.float32)

    out3 = jax.block_until_ready(dice_loss(inputs3, target3, softmax=False))
    ref3 = ref_dice_loss(inputs3, target3, softmax=False)
    assert jnp.allclose(out3, ref3, atol=1e-5, rtol=1e-5), (out3, ref3)

    print("KERNEL_OK")
</pallas_src>

<mosaic_0001>
module attributes {stable_mosaic.version = 11 : i64} {
  func.func @kernel(%arg0: i32, %arg1: i32, %arg2: memref<1x4x8x128xf32, #tpu.memory_space<vmem>>, %arg3: memref<1x4x8x128xf32, #tpu.memory_space<vmem>>, %arg4: memref<1x4x3xf32, #tpu.memory_space<vmem>>) attributes {dimension_semantics = [#tpu.dimension_semantics<parallel>, #tpu.dimension_semantics<arbitrary>], iteration_bounds = array<i64: 2, 1>, scalar_prefetch = 0 : i64, scratch_operands = 0 : i64, tpu.core_type = #tpu.core_type<tc>, window_params = [{transform_indices = @transform_0, window_bounds = array<i64: 1, 4, 8, 128>}, {transform_indices = @transform_1, window_bounds = array<i64: 1, 4, 8, 128>}, {transform_indices = @transform_2, window_bounds = array<i64: 1, 4, 3>}]} {
    %c0_i32 = arith.constant 0 : i32
    %0 = arith.cmpi eq, %arg1, %c0_i32 : i32
    %1 = arith.extui %0 : i1 to i32
    %c0_i32_0 = arith.constant 0 : i32
    %2 = arith.cmpi ne, %1, %c0_i32_0 : i32
    scf.if %2 {
      %cst_21 = arith.constant 0.000000e+00 : f32
      %51 = vector.broadcast %cst_21 : f32 to vector<4x3xf32>
      %c0_22 = arith.constant 0 : index
      %c0_23 = arith.constant 0 : index
      %c0_24 = arith.constant 0 : index
      %52 = vector.load %arg4[%c0_22, %c0_23, %c0_24] : memref<1x4x3xf32, #tpu.memory_space<vmem>>, vector<1x4x3xf32>
      %53 = vector.shape_cast %52 : vector<1x4x3xf32> to vector<4x3xf32>
      %54 = vector.shape_cast %51 : vector<4x3xf32> to vector<1x4x3xf32>
      tpu.vector_store %arg4[%c0_22, %c0_23, %c0_24], %54 {strides = array<i32>} : memref<1x4x3xf32, #tpu.memory_space<vmem>>, vector<1x4x3xf32>,
    } else {
    }
    %c0 = arith.constant 0 : index
    %c0_1 = arith.constant 0 : index
    %c0_2 = arith.constant 0 : index
    %c0_3 = arith.constant 0 : index
    %3 = vector.load %arg2[%c0, %c0_1, %c0_2, %c0_3] : memref<1x4x8x128xf32, #tpu.memory_space<vmem>>, vector<1x4x8x128xf32>
    %4 = vector.shape_cast %3 : vector<1x4x8x128xf32> to vector<4x8x128xf32>
    %c0_4 = arith.constant 0 : index
    %c0_5 = arith.constant 0 : index
    %c0_6 = arith.constant 0 : index
    %c0_7 = arith.constant 0 : index
    %5 = vector.load %arg3[%c0_4, %c0_5, %c0_6, %c0_7] : memref<1x4x8x128xf32, #tpu.memory_space<vmem>>, vector<1x4x8x128xf32>
    %6 = vector.shape_cast %5 : vector<1x4x8x128xf32> to vector<4x8x128xf32>
    %7 = arith.negf %4 : vector<4x8x128xf32>
    %8 = math.exp %7 : vector<4x8x128xf32>
    %cst = arith.constant 1.000000e+00 : f32
    %9 = vector.broadcast %cst : f32 to vector<4x8x128xf32>
    %10 = arith.addf %9, %8 : vector<4x8x128xf32>
    %11 = arith.divf %9, %10 : vector<4x8x128xf32>
    %12 = tpu.iota {dimensions = array<i32: 1>} : vector<1x8x128xi32>
    %13 = tpu.iota {dimensions = array<i32: 2>} : vector<1x8x128xi32>
    %c8_i32 = arith.constant 8 : i32
    %14 = arith.muli %arg1, %c8_i32 : i32
    %15 = vector.broadcast %14 : i32 to vector<1x8x128xi32>
    %16 = arith.addi %15, %12 : vector<1x8x128xi32>
    %c128_i32 = arith.constant 128 : i32
    %17 = vector.broadcast %c128_i32 : i32 to vector<1x8x128xi32>
    %18 = arith.muli %16, %17 : vector<1x8x128xi32>
    %19 = arith.addi %18, %13 : vector<1x8x128xi32>
    %c256_i32 = arith.constant 256 : i32
    %20 = vector.broadcast %c256_i32 : i32 to vector<1x8x128xi32>
    %21 = arith.cmpi slt, %19, %20 : vector<1x8x128xi32>
    %cst_8 = arith.constant 0.000000e+00 : f32
    %22 = vector.shape_cast %21 : vector<1x8x128xi1> to vector<1x8x128xi1>
    %23 = vector.broadcast %22 : vector<1x8x128xi1> to vector<4x8x128xi1>
    %24 = vector.broadcast %cst_8 : f32 to vector<4x8x128xf32>
    %25 = arith.select %23, %11, %24 : vector<4x8x128xi1>, vector<4x8x128xf32>
    %26 = arith.mulf %25, %6 : vector<4x8x128xf32>
    %cst_9 = arith.constant dense<0.000000e+00> : vector<4x8xf32>
    %27 = vector.multi_reduction <add>, %26, %cst_9 [2] : vector<4x8x128xf32> to vector<4x8xf32>
    %28 = vector.shape_cast %27 : vector<4x8xf32> to vector<4x8x1xf32>
    %cst_10 = arith.constant dense<0.000000e+00> : vector<4x1xf32>
    %29 = vector.multi_reduction <add>, %28, %cst_10 [1] : vector<4x8x1xf32> to vector<4x1xf32>
    %30 = vector.shape_cast %29 : vector<4x1xf32> to vector<4x1x1xf32>
    %31 = vector.shape_cast %30 : vector<4x1x1xf32> to vector<4x1xf32>
    %32 = arith.mulf %6, %6 : vector<4x8x128xf32>
    %cst_11 = arith.constant dense<0.000000e+00> : vector<4x8xf32>
    %33 = vector.multi_reduction <add>, %32, %cst_11 [2] : vector<4x8x128xf32> to vector<4x8xf32>
    %34 = vector.shape_cast %33 : vector<4x8xf32> to vector<4x8x1xf32>
    %cst_12 = arith.constant dense<0.000000e+00> : vector<4x1xf32>
    %35 = vector.multi_reduction <add>, %34, %cst_12 [1] : vector<4x8x1xf32> to vector<4x1xf32>
    %36 = vector.shape_cast %35 : vector<4x1xf32> to vector<4x1x1xf32>
    %37 = vector.shape_cast %36 : vector<4x1x1xf32> to vector<4x1xf32>
    %38 = arith.mulf %25, %25 : vector<4x8x128xf32>
    %cst_13 = arith.constant dense<0.000000e+00> : vector<4x8xf32>
    %39 = vector.multi_reduction <add>, %38, %cst_13 [2] : vector<4x8x128xf32> to vector<4x8xf32>
    %40 = vector.shape_cast %39 : vector<4x8xf32> to vector<4x8x1xf32>
    %cst_14 = arith.constant dense<0.000000e+00> : vector<4x1xf32>
    %41 = vector.multi_reduction <add>, %40, %cst_14 [1] : vector<4x8x1xf32> to vector<4x1xf32>
    %42 = vector.shape_cast %41 : vector<4x1xf32> to vector<4x1x1xf32>
    %43 = vector.shape_cast %42 : vector<4x1x1xf32> to vector<4x1xf32>
    %c0_15 = arith.constant 0 : index
    %c0_16 = arith.constant 0 : index
    %c0_17 = arith.constant 0 : index
    %44 = vector.load %arg4[%c0_15, %c0_16, %c0_17] : memref<1x4x3xf32, #tpu.memory_space<vmem>>, vector<1x4x3xf32>
    %45 = vector.shape_cast %44 : vector<1x4x3xf32> to vector<4x3xf32>
    %46 = tpu.concatenate %31, %37, %43 in 1 : vector<4x1xf32>, vector<4x1xf32>, vector<4x1xf32> -> vector<4x3xf32>
    %47 = arith.addf %45, %46 : vector<4x3xf32>
    %c0_18 = arith.constant 0 : index
    %c0_19 = arith.constant 0 : index
    %c0_20 = arith.constant 0 : index
    %48 = vector.load %arg4[%c0_18, %c0_19, %c0_20] : memref<1x4x3xf32, #tpu.memory_space<vmem>>, vector<1x4x3xf32>
    %49 = vector.shape_cast %48 : vector<1x4x3xf32> to vector<4x3xf32>
    %50 = vector.shape_cast %47 : vector<4x3xf32> to vector<1x4x3xf32>
    tpu.vector_store %arg4[%c0_18, %c0_19, %c0_20], %50 {strides = array<i32>} : memref<1x4x3xf32, #tpu.memory_space<vmem>>, vector<1x4x3xf32>,
    return
  }
  func.func @transform_0(%arg0: i32, %arg1: i32) -> (i32, i32, i32, i32) {
    %c0_i32 = arith.constant 0 : i32
    %c0_i32_0 = arith.constant 0 : i32
    %c0_i32_1 = arith.constant 0 : i32
    return %arg0, %c0_i32, %arg1, %c0_i32_0 : i32, i32, i32, i32
  }
  func.func @transform_1(%arg0: i32, %arg1: i32) -> (i32, i32, i32, i32) {
    %c0_i32 = arith.constant 0 : i32
    %c0_i32_0 = arith.constant 0 : i32
    %c0_i32_1 = arith.constant 0 : i32
    return %arg0, %c0_i32, %arg1, %c0_i32_0 : i32, i32, i32, i32
  }
  func.func @transform_2(%arg0: i32, %arg1: i32) -> (i32, i32, i32) {
    %c0_i32 = arith.constant 0 : i32
    %c0_i32_0 = arith.constant 0 : i32
    %c0_i32_1 = arith.constant 0 : i32
    return %arg0, %c0_i32, %c0_i32_0 : i32, i32, i32
  }
}

</mosaic_0001>

<llo_original>
// kernel: dice_loss.1
$region0: #{dice_loss.1}
  #allocation0 [shape = 'u32[]', space=smem, size = 0x4, offset = 0x4, fixed_abs, tag = 'smem constant byte address 0x4 - core index']
  #allocation1 [shape = 'u32[144,128]{1,0:T(1,128)}', space=vmem, size = 0x12000, scoped, tag = 'internal scratch']
  %s0 = inlined_call_operand.vmem [shape: f32[2,4,8,128], index: 0, kind: input, shape index: {}]
  %s1 = inlined_call_operand.vmem [shape: f32[2,4,8,128], index: 1, kind: input, shape index: {}]
  %s2 = inlined_call_operand.vmem [shape: f32[2,4,3], index: 2, kind: output, shape index: {}]
  %s3 = sld [smem:[#allocation0]]
  $region45: #{dice_loss.1} parent=0
    _
  %s5 = ssub.s32 1, %s3
  %s6 = scalar_select 0, %s5, %s3
  loop: start=0, step=1, limit=4
  $region2: #{dice_loss.1} parent=0 // loop_pre_header
    _
  $region3: #{dice_loss.1} parent=0 // loop_header
    %s8 = sphi 0, %s12
    %p9 = scmp.ge.s32.totalorder %s8, 4
    %s15 = sphi 0, %s27
    %s16 = sphi 0, %s23
    %s17 = sphi 0, %s15
    %s18 = sphi 0, %s16
    %s19 = sphi 0, %s17
    %s20 = sphi 0, %s18
    %s32 = sphi 0, %s34
    %s35 = sphi 0, %s32
    %s36 = sphi 0, %s35
    %s52 = sphi 0, %s36
    %s60 = sphi 0, %s62
    %s63 = sphi 0, %s60
    %s64 = sphi 0, %s63
    %s80 = sphi 0, %s64
    %s86 = sphi 0, %s88
    %s89 = sphi 0, %s86
    %s90 = sphi 0, %s89
    %s106 = sphi 0, %s90
  $region4: #{dice_loss.1} parent=0 // loop_header_branch
    %11 = sbr.rel (%p9) target = $region8
  $region5: #{dice_loss.1} parent=0 // loop_body
    %s13 = ssub.s32 %s8, 1
    %s14 = ssub.s32 %s8, 2
    %s21 = sadd.s32 1, %s16
    %p22 = scmp.ge.s32.totalorder %s21, 1
    %s23 = scalar_select %p22, 0, %s21
    %s24 = sadd.s32 1, %s15
    %s25 = scalar_select %p22, %s24, %s15
    %p26 = scmp.ge.s32.totalorder %s25, 2
    %s27 = scalar_select %p26, 0, %s25
    %s28 = ssub.s32 %s15, %s27
    %s29 = ssub.s32 %s16, %s23
    %s30 = sor.u32 %s28, %s29
    %p31 = scmp.eq.s32.totalorder %s30, 0
    %s33 = sadd.s32 %s32, 1
    %s34 = scalar_select %p31, %s32, %s33
    %p37 = pneg %p31
    %p38 = scmp.eq.s32.totalorder %s8, 1
    %p39 = por %p37, %p38
    %p40 = scmp.ne.s32.totalorder %s32, %s35
    %p41 = scmp.eq.s32.totalorder %s8, 0
    %p42 = por %p40, %p41
    %p43 = scmp.ne.s32.totalorder %s32, %s35
    %p44 = scmp.eq.s32.totalorder %s13, 1
    %p45 = por %p43, %p44
    %p46 = scmp.ne.s32.totalorder %s35, %s36
    %p47 = scmp.eq.s32.totalorder %s13, 0
    %p48 = por %p46, %p47
    %p49 = scmp.ne.s32.totalorder %s35, %s36
    %p50 = scmp.eq.s32.totalorder %s14, 1
    %p51 = por %p49, %p50
    %p53 = scmp.ne.s32.totalorder %s36, %s52
    %p54 = scmp.eq.s32.totalorder %s14, 0
    %p55 = por %p53, %p54
    %s56 = ssub.s32 %s15, %s27
    %s57 = ssub.s32 %s16, %s23
    %s58 = sor.u32 %s56, %s57
    %p59 = scmp.eq.s32.totalorder %s58, 0
    %s61 = sadd.s32 %s60, 1
    %s62 = scalar_select %p59, %s60, %s61
    %p65 = pneg %p59
    %p66 = scmp.eq.s32.totalorder %s8, 1
    %p67 = por %p65, %p66
    %p68 = scmp.ne.s32.totalorder %s60, %s63
    %p69 = scmp.eq.s32.totalorder %s8, 0
    %p70 = por %p68, %p69
    %p71 = scmp.ne.s32.totalorder %s60, %s63
    %p72 = scmp.eq.s32.totalorder %s13, 1
    %p73 = por %p71, %p72
    %p74 = scmp.ne.s32.totalorder %s63, %s64
    %p75 = scmp.eq.s32.totalorder %s13, 0
    %p76 = por %p74, %p75
    %p77 = scmp.ne.s32.totalorder %s63, %s64
    %p78 = scmp.eq.s32.totalorder %s14, 1
    %p79 = por %p77, %p78
    %p81 = scmp.ne.s32.totalorder %s64, %s80
    %p82 = scmp.eq.s32.totalorder %s14, 0
    %p83 = por %p81, %p82
    %s84 = ssub.s32 %s15, %s27
    %p85 = scmp.eq.s32.totalorder %s84, 0
    %s87 = sadd.s32 %s86, 1
    %s88 = scalar_select %p85, %s86, %s87
    %p91 = pneg %p85
    %p92 = scmp.eq.s32.totalorder %s8, 1
    %p93 = por %p91, %p92
    %p94 = scmp.ne.s32.totalorder %s86, %s89
    %p95 = scmp.eq.s32.totalorder %s8, 0
    %p96 = por %p94, %p95
    %p97 = scmp.ne.s32.totalorder %s86, %s89
    %p98 = scmp.eq.s32.totalorder %s13, 1
    %p99 = por %p97, %p98
    %p100 = scmp.ne.s32.totalorder %s89, %s90
    %p101 = scmp.eq.s32.totalorder %s13, 0
    %p102 = por %p100, %p101
    %p103 = scmp.ne.s32.totalorder %s89, %s90
    %p104 = scmp.eq.s32.totalorder %s14, 1
    %p105 = por %p103, %p104
    %p107 = scmp.ne.s32.totalorder %s90, %s106
    %p108 = scmp.eq.s32.totalorder %s14, 0
    %p109 = por %p107, %p108
    %p110 = scmp.le.s32.totalorder 1, %s8
    %p111 = scmp.lt.s32.totalorder %s8, 3
    %p112 = pnand %p110, %p111
    %p113 = pneg %p112
    // Predicated region
    $region9: #{dice_loss.1} parent=5 // pred_check
      _
    $region10: #{dice_loss.1} parent=5 // pred_check_branch
      %115 = sbr.rel (%p112) target = $region12
    $region11: #{dice_loss.1} parent=5 // pred_region
      %s116 = ssub.s32 %s8, 1
    $region12: #{dice_loss.1} parent=5 // pred_fallthru
      _
    %p117 = scmp.lt.s32.totalorder %s8, 2
    // Predicated region
    $region13: #{dice_loss.1} parent=5 // pred_check
      %p118 = pneg %p117
    $region14: #{dice_loss.1} parent=5 // pred_check_branch
      %120 = sbr.rel (%p118) target = $region16
    $region15: #{dice_loss.1} parent=5 // pred_region
      // Predicated region
      $region17: #{dice_loss.1} parent=15 // pred_check
        %p121 = pneg %p42
      $region18: #{dice_loss.1} parent=15 // pred_check_branch
        %123 = sbr.rel (%p121) target = $region20
      $region19: #{dice_loss.1} parent=15 // pred_region
        %p124 = scmp.lt.s32.totalorder %s15, 1
        %s125 = scalar_select %p124, %s15, 1
        %p126 = scmp.lt.s32.totalorder %s16, 0
        %s127 = scalar_select %p126, %s16, 0
        %s128 = smul.addr %s125, 4
        %s129 = sadd.s32 %s127, %s128
        %s130 = smul.addr %s129, 8
        %s131 = scalar_lea.vmem %s0, %s130
      $region20: #{dice_loss.1} parent=15 // pred_fallthru
        _
      // Predicated region
      $region21: #{dice_loss.1} parent=15 // pred_check
        %p132 = pneg %p70
      $region22: #{dice_loss.1} parent=15 // pred_check_branch
        %134 = sbr.rel (%p132) target = $region24
      $region23: #{dice_loss.1} parent=15 // pred_region
        %p135 = scmp.lt.s32.totalorder %s15, 1
        %s136 = scalar_select %p135, %s15, 1
        %p137 = scmp.lt.s32.totalorder %s16, 0
        %s138 = scalar_select %p137, %s16, 0
        %s139 = smul.addr %s136, 4
        %s140 = sadd.s32 %s138, %s139
        %s141 = smul.addr %s140, 8
        %s142 = scalar_lea.vmem %s1, %s141
      $region24: #{dice_loss.1} parent=15 // pred_fallthru
        _
    $region16: #{dice_loss.1} parent=5 // pred_fallthru
      _
    %p143 = scmp.le.s32.totalorder 1, %s8
    %p144 = scmp.lt.s32.totalorder %s8, 3
    %p145 = pnand %p143, %p144
    %p146 = pneg %p145
    // Predicated region
    $region25: #{dice_loss.1} parent=5 // pred_check
      _
    $region26: #{dice_loss.1} parent=5 // pred_check_branch
      %148 = sbr.rel (%p145) target = $region28
    $region27: #{dice_loss.1} parent=5 // pred_region
      %s149 = ssub.s32 %s8, 1
      %p150 = scmp.lt.s32.totalorder %s17, 1
      %s151 = scalar_select %p150, %s17, 1
      %p152 = scmp.lt.s32.totalorder %s18, 0
      %s153 = scalar_select %p152, %s18, 0
      %s154 = smul.addr %s151, 4
      %s155 = sadd.s32 %s153, %s154
      %s156 = smul.addr %s155, 8
      %s157 = scalar_lea.vmem %s0, %s156
      %p158 = pneg %p48
      %p159 = pneg %p45
      %p160 = scmp.lt.s32.totalorder %s17, 1
      %s161 = scalar_select %p160, %s17, 1
      %p162 = scmp.lt.s32.totalorder %s18, 0
      %s163 = scalar_select %p162, %s18, 0
      %s164 = smul.addr %s161, 4
      %s165 = sadd.s32 %s163, %s164
      %s166 = smul.addr %s165, 8
      %s167 = scalar_lea.vmem %s1, %s166
      %p168 = pneg %p76
      %p169 = pneg %p73
      %p170 = pneg %p102
      %p171 = pneg %p99
      %p172 = scmp.lt.s32.totalorder %s17, 1
      %s173 = scalar_select %p172, %s17, 1
      %s174 = smul.addr %s173, 4
      %s175 = scalar_lea.vmem %s2, %s174
      %p176 = scmp.lt.s32.totalorder %s17, 1
      %s177 = scalar_select %p176, %s17, 1
      %p178 = scmp.lt.s32.totalorder %s18, 0
      %s179 = scalar_select %p178, %s18, 0
      %s180 = smul.addr %s177, 4
      %s181 = sadd.s32 %s179, %s180
      %s182 = smul.addr %s181, 8
      %s183 = scalar_lea.vmem %s0, %s182
      %p184 = scmp.lt.s32.totalorder %s17, 1
      %s185 = scalar_select %p184, %s17, 1
      %p186 = scmp.lt.s32.totalorder %s18, 0
      %s187 = scalar_select %p186, %s18, 0
      %s188 = smul.addr %s185, 4
      %s189 = sadd.s32 %s187, %s188
      %s190 = smul.addr %s189, 8
      %s191 = scalar_lea.vmem %s1, %s190
      %p192 = scmp.lt.s32.totalorder %s17, 1
      %s193 = scalar_select %p192, %s17, 1
      %s194 = smul.addr %s193, 4
      %s195 = scalar_lea.vmem %s2, %s194
      %p196 = scmp.eq.s32.totalorder %s18, 0
      // Predicated region
      $region29: #{dice_loss.1} parent=27 // pred_check
        %p197 = pneg %p196
      $region30: #{dice_loss.1} parent=27 // pred_check_branch
        %199 = sbr.rel (%p197) target = $region32
      $region31: #{dice_loss.1} parent=27 // pred_region
        %vm200 = vcmask 19456
        %201 = vst.msk [vmem:[%s195] sm:$0xf] %vm200, 0.0
      $region32: #{dice_loss.1} parent=27 // pred_fallthru
        _
      %v202 = vld [vmem:[%s183] sm:$0xff]
      %v203 = vld [vmem:[%s183 + $0x8] sm:$0xff]
      %v204 = vld [vmem:[%s183 + $0x10] sm:$0xff]
      %v205 = vld [vmem:[%s183 + $0x18] sm:$0xff]
      %v206 = vld [vmem:[%s191] sm:$0xff]
      %v207 = vld [vmem:[%s191 + $0x8] sm:$0xff]
      %v208 = vld [vmem:[%s191 + $0x10] sm:$0xff]
      %v209 = vld [vmem:[%s191 + $0x18] sm:$0xff]
      %v210 = vxor.u32 %v202, 2147483648
      %v211 = vxor.u32 %v203, 2147483648
      %v212 = vxor.u32 %v204, 2147483648
      %v213 = vxor.u32 %v205, 2147483648
      %v214 = vmul.f32 %v210, 1.442695
      %v215 = vpow.pop %v214
      %v216 = vmul.f32 %v211, 1.442695
      %v217 = vpow.pop %v216
      %v218 = vmul.f32 %v212, 1.442695
      %v219 = vpow.pop %v218
      %v220 = vmul.f32 %v213, 1.442695
      %v221 = vpow.pop %v220
      %v222 = vadd.f32 %v215, 1.0
      %v223 = vadd.f32 %v217, 1.0
      %v224 = vadd.f32 %v219, 1.0
      %v225 = vadd.f32 %v221, 1.0
      %v226 = vrcp.pop %v222
      %v227 = vmul.f32 1.0, %v226
      %v228 = vrcp.pop %v223
      %v229 = vmul.f32 1.0, %v228
      %v230 = vrcp.pop %v224
      %v231 = vmul.f32 1.0, %v230
      %v232 = vrcp.pop %v225
      %v233 = vmul.f32 1.0, %v232
      %v234 = vlaneseq
      %v235 = vshrl.u32 %v234, 7
      %v236 = vlaneseq
      %v237 = vand.u32 %v236, 127
      %s238 = smul.u32 %s18, 8
      %v239 = vstv %s238
      %v240 = vadd.s32 %v239, %v235
      %v241 = vmul.u32 %v240, 128
      %v242 = vadd.s32 %v241, %v237
      %vm243 = vcmp.lt.s32.totalorder %v242, 256
      %v244 = vsel %vm243, 1, 0
      %vm245 = vcmp.eq.s32.totalorder %v244, 1
      %v246 = vsel %vm245, %v227, 0.0
      %v247 = vsel %vm245, %v229, 0.0
      %v248 = vsel %vm245, %v231, 0.0
      %v249 = vsel %vm245, %v233, 0.0
      %v250 = vmul.f32 %v246, %v206
      %v251 = vmul.f32 %v247, %v207
      %v252 = vmul.f32 %v248, %v208
      %v253 = vmul.f32 %v249, %v209
      %254 = vadd.xlane.f32.xlu0 %v250
      %v255 = vpop.xlane.xlu0 %254
      %256 = vadd.xlane.f32.xlu0 %v251
      %v257 = vpop.xlane.xlu0 %256
      %258 = vadd.xlane.f32.xlu0 %v252
      %v259 = vpop.xlane.xlu0 %258
      %260 = vadd.xlane.f32.xlu0 %v253
      %v261 = vpop.xlane.xlu0 %260
      %v262 = vrot.slane %v255, 4
      %v263 = vadd.f32 %v255, %v262
      %v264 = vrot.slane %v263, 2
      %v265 = vadd.f32 %v263, %v264
      %v266 = vrot.slane %v265, 1
      %v267 = vadd.f32 %v265, %v266
      %v268 = vrot.slane %v257, 4
      %v269 = vadd.f32 %v257, %v268
      %v270 = vrot.slane %v269, 2
      %v271 = vadd.f32 %v269, %v270
      %v272 = vrot.slane %v271, 1
      %v273 = vadd.f32 %v271, %v272
      %v274 = vrot.slane %v259, 4
      %v275 = vadd.f32 %v259, %v274
      %v276 = vrot.slane %v275, 2
      %v277 = vadd.f32 %v275, %v276
      %v278 = vrot.slane %v277, 1
      %v279 = vadd.f32 %v277, %v278
      %v280 = vrot.slane %v261, 4
      %v281 = vadd.f32 %v261, %v280
      %v282 = vrot.slane %v281, 2
      %v283 = vadd.f32 %v281, %v282
      %v284 = vrot.slane %v283, 1
      %v285 = vadd.f32 %v283, %v284
      %v286 = vmul.f32 %v206, %v206
      %v287 = vmul.f32 %v207, %v207
      %v288 = vmul.f32 %v208, %v208
      %v289 = vmul.f32 %v209, %v209
      %290 = vadd.xlane.f32.xlu0 %v286
      %v291 = vpop.xlane.xlu0 %290
      %292 = vadd.xlane.f32.xlu0 %v287
      %v293 = vpop.xlane.xlu0 %292
      %294 = vadd.xlane.f32.xlu0 %v288
      %v295 = vpop.xlane.xlu0 %294
      %296 = vadd.xlane.f32.xlu0 %v289
      %v297 = vpop.xlane.xlu0 %296
      %v298 = vrot.slane %v291, 4
      %v299 = vadd.f32 %v291, %v298
      %v300 = vrot.slane %v299, 2
      %v301 = vadd.f32 %v299, %v300
      %v302 = vrot.slane %v301, 1
      %v303 = vadd.f32 %v301, %v302
      %v304 = vrot.slane %v293, 4
      %v305 = vadd.f32 %v293, %v304
      %v306 = vrot.slane %v305, 2
      %v307 = vadd.f32 %v305, %v306
      %v308 = vrot.slane %v307, 1
      %v309 = vadd.f32 %v307, %v308
      %v310 = vrot.slane %v295, 4
      %v311 = vadd.f32 %v295, %v310
      %v312 = vrot.slane %v311, 2
      %v313 = vadd.f32 %v311, %v312
      %v314 = vrot.slane %v313, 1
      %v315 = vadd.f32 %v313, %v314
      %v316 = vrot.slane %v297, 4
      %v317 = vadd.f32 %v297, %v316
      %v318 = vrot.slane %v317, 2
      %v319 = vadd.f32 %v317, %v318
      %v320 = vrot.slane %v319, 1
      %v321 = vadd.f32 %v319, %v320
      %v322 = vmul.f32 %v246, %v246
      %v323 = vmul.f32 %v247, %v247
      %v324 = vmul.f32 %v248, %v248
      %v325 = vmul.f32 %v249, %v249
      %326 = vadd.xlane.f32.xlu0 %v322
      %v327 = vpop.xlane.xlu0 %326
      %328 = vadd.xlane.f32.xlu0 %v323
      %v329 = vpop.xlane.xlu0 %328
      %330 = vadd.xlane.f32.xlu0 %v324
      %v331 = vpop.xlane.xlu0 %330
      %332 = vadd.xlane.f32.xlu0 %v325
      %v333 = vpop.xlane.xlu0 %332
      %v334 = vrot.slane %v327, 4
      %v335 = vadd.f32 %v327, %v334
      %v336 = vrot.slane %v335, 2
      %v337 = vadd.f32 %v335, %v336
      %v338 = vrot.slane %v337, 1
      %v339 = vadd.f32 %v337, %v338
      %v340 = vrot.slane %v329, 4
      %v341 = vadd.f32 %v329, %v340
      %v342 = vrot.slane %v341, 2
      %v343 = vadd.f32 %v341, %v342
      %v344 = vrot.slane %v343, 1
      %v345 = vadd.f32 %v343, %v344
      %v346 = vrot.slane %v331, 4
      %v347 = vadd.f32 %v331, %v346
      %v348 = vrot.slane %v347, 2
      %v349 = vadd.f32 %v347, %v348
      %v350 = vrot.slane %v349, 1
      %v351 = vadd.f32 %v349, %v350
      %v352 = vrot.slane %v333, 4
      %v353 = vadd.f32 %v333, %v352
      %v354 = vrot.slane %v353, 2
      %v355 = vadd.f32 %v353, %v354
      %v356 = vrot.slane %v355, 1
      %v357 = vadd.f32 %v355, %v356
      %v358 = vld [vmem:[%s195] sm:$0xf]
      %vm363 = vcmask 1041409
      %v364 = vsel %vm363, %v273, %v267
      %vm365 = vcmask 1042434
      %v366 = vsel %vm365, %v279, %v364
      %vm367 = vcmask 1043459
      %v368 = vsel %vm367, %v285, %v366
      %v374 = vsel %vm363, %v309, %v303
      %v375 = vsel %vm365, %v315, %v374
      %v376 = vsel %vm367, %v321, %v375
      %v382 = vsel %vm363, %v345, %v339
      %v383 = vsel %vm365, %v351, %v382
      %v384 = vsel %vm367, %v357, %v383
      %vm386 = vcmask 7168
      %v387 = vsel %vm386, %v368, %v376
      %vm388 = vcmask 15360
      %v389 = vsel %vm388, %v387, %v384
      %v390 = vadd.f32 %v358, %v389
      %vm391 = vcmask 19456
      %392 = vst.msk [vmem:[%s195] sm:$0xf] %vm391, %v390
      %p393 = scmp.lt.s32.totalorder %s17, 1
      %s394 = scalar_select %p393, %s17, 1
      %s395 = smul.addr %s394, 4
      %s396 = scalar_lea.vmem %s2, %s395
      // Predicated region
      $region33: #{dice_loss.1} parent=27 // pred_check
        %p397 = pneg %p99
      $region34: #{dice_loss.1} parent=27 // pred_check_branch
        %399 = sbr.rel (%p397) target = $region36
      $region35: #{dice_loss.1} parent=27 // pred_region
        _
      $region36: #{dice_loss.1} parent=27 // pred_fallthru
        _
    $region28: #{dice_loss.1} parent=5 // pred_fallthru
      _
    %p400 = scmp.le.s32.totalorder 2, %s8
    // Predicated region
    $region37: #{dice_loss.1} parent=5 // pred_check
      %p401 = pneg %p400
    $region38: #{dice_loss.1} parent=5 // pred_check_branch
      %403 = sbr.rel (%p401) target = $region40
    $region39: #{dice_loss.1} parent=5 // pred_region
      %s404 = ssub.s32 %s8, 2
      // Predicated region
      $region41: #{dice_loss.1} parent=39 // pred_check
        %p405 = pneg %p105
      $region42: #{dice_loss.1} parent=39 // pred_check_branch
        %407 = sbr.rel (%p405) target = $region44
      $region43: #{dice_loss.1} parent=39 // pred_region
        %p408 = scmp.lt.s32.totalorder %s19, 1
        %s409 = scalar_select %p408, %s19, 1
        %s410 = smul.addr %s409, 4
        %s411 = scalar_lea.vmem %s2, %s410
      $region44: #{dice_loss.1} parent=39 // pred_fallthru
        _
    $region40: #{dice_loss.1} parent=5 // pred_fallthru
      _
  $region6: #{dice_loss.1} parent=0 // loop_footer
    %s12 = sadd.s32 1, %s8
  $region7: #{dice_loss.1} parent=0 // loop_footer_branch
    %7 = sbr.rel target = $region3
  $region8: #{dice_loss.1} parent=0 // loop_exit
    _

</llo_original>
